<compile_context>
chip_gen: v6e
topology: v6e:2x2x1
jax: 0.10.0
libtpu: 0.0.40
codegen_flags: <defaults>
</compile_context>

<pallas_src>
import math

import jax
import jax.numpy as jnp
from jax.experimental import pallas as pl
from jax.experimental.pallas import tpu as pltpu


def _pair(v):
    return (v, v) if isinstance(v, int) else tuple(v)


def _vmem_params():
    """(double-buffered block budget, vmem_limit_bytes) per TPU generation."""
    try:
        kind = jax.devices()[0].device_kind.lower()
    except Exception:  # pragma: no cover - CPU/interpret fallback
        kind = ""
    if "v5e" in kind or "v5 lite" in kind or "v5lite" in kind:
        return 12 << 20, 32 << 20        # 16 MiB scoped default, 128 MiB phys
    if "v6" in kind:
        return 28 << 20, 64 << 20        # 32 MiB scoped default, 128 MiB phys
    if "v7" in kind or "7x" in kind:
        return 24 << 20, 48 << 20        # 64 MiB physical, shared w/ scratch
    return 16 << 20, 32 << 20            # unknown / older: conservative


def _make_samepad_kernel(pad_top, pad_bottom, pad_left, pad_right, H, W, dtype):
    W_out = W + pad_left + pad_right

    def kernel(x_ref, o_ref):
        ct = x_ref.shape[0]
        x = x_ref[...]                                   # (ct, H, W)

        # Pad along W in-register (lane-dim concatenate).  The shift/select
        # work lands on XLU/VPU slots which are idle in this store-bound
        # kernel; in exchange every store below is full-width and starts at
        # lane 0 (no vst.msk partial stores).
        pieces = []
        if pad_left:
            pieces.append(jnp.zeros((ct, H, pad_left), dtype))
        pieces.append(x)
        if pad_right:
            pieces.append(jnp.zeros((ct, H, pad_right), dtype))
        xw = pieces[0] if len(pieces) == 1 else jnp.concatenate(pieces, axis=2)

        # Full-width zero strips for the top / bottom pad rows (corners are
        # covered here).  Zero-height strips are skipped at trace time, so
        # every output element is written exactly once.
        if pad_top:
            o_ref[:, 0:pad_top, :] = jnp.zeros((ct, pad_top, W_out), dtype)
        if pad_bottom:
            o_ref[:, pad_top + H:pad_top + H + pad_bottom, :] = jnp.zeros(
                (ct, pad_bottom, W_out), dtype)

        # Single full-width store of the W-padded data rows (lane offset 0).
        if pad_top == 0 and pad_bottom == 0:
            o_ref[...] = xw
        else:
            o_ref[:, pad_top:pad_top + H, :] = xw

    return kernel


def same_pad_2d(x, kernel_size, stride):
    """Exact reproduction of SamePad2d.forward for NCHW input `x`."""
    ks = _pair(kernel_size)
    st = _pair(stride)

    N, C, H, W = x.shape

    # --- Verbatim PyTorch pad math (its variable naming cross-wires dims 2
    # and 3; semantics preserved exactly — only matters for non-square
    # inputs/kernels, which MaskNetwork2 never uses). ---
    in_width = H             # input.size()[2]
    in_height = W            # input.size()[3]
    out_width = math.ceil(float(in_width) / float(st[0]))
    out_height = math.ceil(float(in_height) / float(st[1]))
    pad_along_width = (out_width - 1) * st[0] + ks[0] - in_width
    pad_along_height = (out_height - 1) * st[1] + ks[1] - in_height
    if pad_along_width < 0 or pad_along_height < 0:
        # TODO(synk): F.pad with negative pads crops; not supported by this
        # padding kernel (never occurs in MaskNetwork2: kernel_size >= stride).
        raise NotImplementedError(
            "SamePad2d with kernel_size < stride (negative pad / crop) is not supported")
    pad_left = math.floor(pad_along_width / 2)
    pad_top = math.floor(pad_along_height / 2)
    pad_right = pad_along_width - pad_left
    pad_bottom = pad_along_height - pad_top

    # F.pad(input, (pad_left, pad_right, pad_top, pad_bottom)):
    #   last dim (W) gets (pad_left, pad_right), dim 2 (H) gets (pad_top, pad_bottom).
    H_out = H + pad_top + pad_bottom
    W_out = W + pad_left + pad_right

    if (pad_left, pad_right, pad_top, pad_bottom) == (0, 0, 0, 0):
        return x  # nothing to pad; skip the HBM round trip entirely.

    # --- Tiling: fold (N, C) into one axis.  Channel-tile ct targets the
    # ~1-4 MiB per-block sweet spot, stays inside the generation-aware
    # double-buffered VMEM budget, keeps >=4 grid steps (pipelining + both
    # v7x TensorCores), and does NOT need to divide N*C (clipped last block).
    itemsize = jnp.dtype(x.dtype).itemsize
    NC = N * C
    per_img_bytes = (H * W + H_out * W_out) * itemsize

    block_budget, vmem_limit = _vmem_params()
    block_target = min(4 << 20, max(1 << 20, block_budget // 2))
    ct_budget = max(1, block_target // per_img_bytes)
    min_steps = 4 if NC >= 4 else NC
    ct_cap = max(1, pl.cdiv(NC, max(min_steps, 1)))
    ct = int(max(1, min(ct_budget, ct_cap, NC)))

    steps = pl.cdiv(NC, ct)
    # Prefer an even number of grid steps: v7x shards "parallel" axes across
    # its 2 TensorCores; an odd step count idles one core on the last step.
    if steps > 1 and steps % 2 == 1:
        for c2 in range(ct - 1, max(0, ct // 2), -1):
            if pl.cdiv(NC, c2) % 2 == 0:
                ct = c2
                steps = pl.cdiv(NC, ct)
                break

    # Make sure the scoped-VMEM limit covers the double-buffered block pair
    # (plus slack), but never below the generation default.
    need = 2 * ct * per_img_bytes + (2 << 20)
    vmem_limit = int(max(vmem_limit, need))

    x2 = x.reshape(NC, H, W)                  # free reshape (contiguous)
    kernel = _make_samepad_kernel(
        pad_top, pad_bottom, pad_left, pad_right, H, W, x.dtype)

    out_bytes = NC * H_out * W_out * itemsize
    out2 = pl.pallas_call(
        kernel,
        out_shape=jax.ShapeDtypeStruct((NC, H_out, W_out), x.dtype),
        grid_spec=pltpu.PrefetchScalarGridSpec(
            num_scalar_prefetch=0,
            grid=(int(steps),),
            in_specs=[pl.BlockSpec((ct, H, W), lambda i: (i, 0, 0))],
            out_specs=pl.BlockSpec((ct, H_out, W_out), lambda i: (i, 0, 0)),
        ),
        compiler_params=pltpu.CompilerParams(
            dimension_semantics=("parallel",),
            vmem_limit_bytes=vmem_limit),
        cost_estimate=pl.CostEstimate(
            flops=0,
            transcendentals=0,
            bytes_accessed=int(x.size * itemsize + out_bytes)),
    )(x2)

    return out2.reshape(N, C, H_out, W_out)


if __name__ == "__main__":
    key = jax.random.PRNGKey(0)
    x = jax.random.normal(key, (2, 4, 16, 16), dtype=jnp.float32)

    # SamePad2d(kernel_size=3, stride=1): symmetric (1,1)/(1,1) pad.
    out = jax.block_until_ready(same_pad_2d(x, 3, 1))
    ref = jnp.pad(x, ((0, 0), (0, 0), (1, 1), (1, 1)))
    assert out.shape == ref.shape, (out.shape, ref.shape)
    assert jnp.array_equal(out, ref), "mismatch vs reference (k=3, s=1)"

    # SamePad2d(kernel_size=3, stride=2): asymmetric (0,1)/(0,1) pad
    # (exercises the zero-width strip paths).
    out2 = jax.block_until_ready(same_pad_2d(x, 3, 2))
    ref2 = jnp.pad(x, ((0, 0), (0, 0), (0, 1), (0, 1)))
    assert out2.shape == ref2.shape, (out2.shape, ref2.shape)
    assert jnp.array_equal(out2, ref2), "mismatch vs reference (k=3, s=2)"

    # Non-divisible N*C (exercises the cdiv grid / clipped last block).
    x3 = jax.random.normal(key, (1, 5, 16, 16), dtype=jnp.float32)
    out3 = jax.block_until_ready(same_pad_2d(x3, 3, 1))
    ref3 = jnp.pad(x3, ((0, 0), (0, 0), (1, 1), (1, 1)))
    assert out3.shape == ref3.shape, (out3.shape, ref3.shape)
    assert jnp.array_equal(out3, ref3), "mismatch vs reference (NC=5)"

    # bf16 (packed dtype), kernel_size=5 -> (2,2)/(2,2) pad.
    xb = jax.random.normal(key, (2, 4, 16, 16), dtype=jnp.bfloat16)
    outb = jax.block_until_ready(same_pad_2d(xb, 5, 1))
    refb = jnp.pad(xb, ((0, 0), (0, 0), (2, 2), (2, 2)))
    assert outb.shape == refb.shape, (outb.shape, refb.shape)
    assert jnp.array_equal(outb, refb), "mismatch vs reference (bf16, k=5)"

    print("KERNEL_OK")
</pallas_src>

<mosaic_0001>
module attributes {stable_mosaic.version = 11 : i64} {
  func.func @kernel(%arg0: i32, %arg1: memref<2x16x16xf32, #tpu.memory_space<vmem>>, %arg2: memref<2x18x18xf32, #tpu.memory_space<vmem>>) attributes {dimension_semantics = [#tpu.dimension_semantics<parallel>], iteration_bounds = array<i64: 4>, scalar_prefetch = 0 : i64, scratch_operands = 0 : i64, tpu.core_type = #tpu.core_type<tc>, window_params = [{transform_indices = @transform_0, window_bounds = array<i64: 2, 16, 16>}, {transform_indices = @transform_1, window_bounds = array<i64: 2, 18, 18>}]} {
    %c0 = arith.constant 0 : index
    %c0_0 = arith.constant 0 : index
    %c0_1 = arith.constant 0 : index
    %0 = vector.load %arg1[%c0, %c0_0, %c0_1] : memref<2x16x16xf32, #tpu.memory_space<vmem>>, vector<2x16x16xf32>
    %cst = arith.constant 0.000000e+00 : f32
    %1 = vector.broadcast %cst : f32 to vector<2x16x1xf32>
    %cst_2 = arith.constant 0.000000e+00 : f32
    %2 = vector.broadcast %cst_2 : f32 to vector<2x16x1xf32>
    %3 = tpu.concatenate %1, %0, %2 in 2 : vector<2x16x1xf32>, vector<2x16x16xf32>, vector<2x16x1xf32> -> vector<2x16x18xf32>
    %cst_3 = arith.constant 0.000000e+00 : f32
    %4 = vector.broadcast %cst_3 : f32 to vector<2x1x18xf32>
    %c0_4 = arith.constant 0 : index
    %c0_5 = arith.constant 0 : index
    %c0_6 = arith.constant 0 : index
    %5 = vector.load %arg2[%c0_4, %c0_5, %c0_6] : memref<2x18x18xf32, #tpu.memory_space<vmem>>, vector<2x1x18xf32>
    tpu.vector_store %arg2[%c0_4, %c0_5, %c0_6], %4 {strides = array<i32>} : memref<2x18x18xf32, #tpu.memory_space<vmem>>, vector<2x1x18xf32>,
    %cst_7 = arith.constant 0.000000e+00 : f32
    %6 = vector.broadcast %cst_7 : f32 to vector<2x1x18xf32>
    %c0_8 = arith.constant 0 : index
    %c17 = arith.constant 17 : index
    %c0_9 = arith.constant 0 : index
    %7 = vector.load %arg2[%c0_8, %c17, %c0_9] : memref<2x18x18xf32, #tpu.memory_space<vmem>>, vector<2x1x18xf32>
    tpu.vector_store %arg2[%c0_8, %c17, %c0_9], %6 {strides = array<i32>} : memref<2x18x18xf32, #tpu.memory_space<vmem>>, vector<2x1x18xf32>,
    %c0_10 = arith.constant 0 : index
    %c1 = arith.constant 1 : index
    %c0_11 = arith.constant 0 : index
    %8 = vector.load %arg2[%c0_10, %c1, %c0_11] : memref<2x18x18xf32, #tpu.memory_space<vmem>>, vector<2x16x18xf32>
    tpu.vector_store %arg2[%c0_10, %c1, %c0_11], %3 {strides = array<i32>} : memref<2x18x18xf32, #tpu.memory_space<vmem>>, vector<2x16x18xf32>,
    return
  }
  func.func @transform_0(%arg0: i32) -> (i32, i32, i32) {
    %c0_i32 = arith.constant 0 : i32
    %c0_i32_0 = arith.constant 0 : i32
    %c0_i32_1 = arith.constant 0 : i32
    return %arg0, %c0_i32, %c0_i32_0 : i32, i32, i32
  }
  func.func @transform_1(%arg0: i32) -> (i32, i32, i32) {
    %c0_i32 = arith.constant 0 : i32
    %c0_i32_0 = arith.constant 0 : i32
    %c0_i32_1 = arith.constant 0 : i32
    return %arg0, %c0_i32, %c0_i32_0 : i32, i32, i32
  }
}

</mosaic_0001>

<llo_original>
// kernel: tpu_custom_call.1
$region0: #{tpu_custom_call.1}
  #allocation0 [shape = 'u32[]', space=smem, size = 0x4, offset = 0x4, fixed_abs, tag = 'smem constant byte address 0x4 - core index']
  #allocation1 [shape = 'u32[144,128]{1,0:T(1,128)}', space=vmem, size = 0x12000, scoped, tag = 'internal scratch']
  %s0 = inlined_call_operand.hbm [shape: f32[8,16,16], index: 0, kind: input, shape index: {}]
  %s1 = inlined_call_operand.vmem [shape: f32[8,18,18], index: 1, kind: output, shape index: {}]
  %s2 = sld [smem:[#allocation0]]
  $region41: #{tpu_custom_call.1} parent=0
    _
  %s4 = ssub.s32 1, %s2
  %s5 = scalar_select 0, %s4, %s2
  $region1: #{tpu_custom_call.1} parent=0
    #allocation2 [shape = 'u8[32768]{0}', space=vmem, size = 0x8000, scoped, tag = 'input window, operand 0']
    #allocation3 [shape = 's32[2]{0}', space=sflag, size = 0x8, scoped, tag = 'scoped memory for tpu_custom_call.1']
    %6 = vsyncpa [#allocation3], 0
    %s7 = scalar_lea.sflag [#allocation3], 1
    %8 = vsyncpa %s7, 0
    loop: start=0, step=1, limit=6
    $region2: #{tpu_custom_call.1} parent=1 // loop_pre_header
      _
    $region3: #{tpu_custom_call.1} parent=1 // loop_header
      %s10 = sphi 0, %s14
      %p11 = scmp.ge.s32.totalorder %s10, 6
      %s20 = sphi 0, %s22
      %s23 = sphi 0, %s20
      %s24 = sphi 0, %s23
      %s40 = sphi 0, %s24
      %s46 = sphi 0, %s48
      %s49 = sphi 0, %s46
      %s50 = sphi 0, %s49
      %s66 = sphi 0, %s50
    $region4: #{tpu_custom_call.1} parent=1 // loop_header_branch
      %13 = sbr.rel (%p11) target = $region8
    $region5: #{tpu_custom_call.1} parent=1 // loop_body
      %s15 = ssub.s32 %s10, 1
      %s16 = ssub.s32 %s10, 2
      %s17 = sadd.s32 %s10, 1
      %s18 = ssub.s32 %s10, %s17
      %p19 = scmp.eq.s32.totalorder %s18, 0
      %s21 = sadd.s32 %s20, 1
      %s22 = scalar_select %p19, %s20, %s21
      %p25 = pneg %p19
      %p26 = scmp.eq.s32.totalorder %s10, 3
      %p27 = por %p25, %p26
      %p28 = scmp.ne.s32.totalorder %s20, %s23
      %p29 = scmp.eq.s32.totalorder %s10, 0
      %p30 = por %p28, %p29
      %p31 = scmp.ne.s32.totalorder %s20, %s23
      %p32 = scmp.eq.s32.totalorder %s15, 3
      %p33 = por %p31, %p32
      %p34 = scmp.ne.s32.totalorder %s23, %s24
      %p35 = scmp.eq.s32.totalorder %s15, 0
      %p36 = por %p34, %p35
      %p37 = scmp.ne.s32.totalorder %s23, %s24
      %p38 = scmp.eq.s32.totalorder %s16, 3
      %p39 = por %p37, %p38
      %p41 = scmp.ne.s32.totalorder %s24, %s40
      %p42 = scmp.eq.s32.totalorder %s16, 0
      %p43 = por %p41, %p42
      %s44 = ssub.s32 %s10, %s17
      %p45 = scmp.eq.s32.totalorder %s44, 0
      %s47 = sadd.s32 %s46, 1
      %s48 = scalar_select %p45, %s46, %s47
      %p51 = pneg %p45
      %p52 = scmp.eq.s32.totalorder %s10, 3
      %p53 = por %p51, %p52
      %p54 = scmp.ne.s32.totalorder %s46, %s49
      %p55 = scmp.eq.s32.totalorder %s10, 0
      %p56 = por %p54, %p55
      %p57 = scmp.ne.s32.totalorder %s46, %s49
      %p58 = scmp.eq.s32.totalorder %s15, 3
      %p59 = por %p57, %p58
      %p60 = scmp.ne.s32.totalorder %s49, %s50
      %p61 = scmp.eq.s32.totalorder %s15, 0
      %p62 = por %p60, %p61
      %p63 = scmp.ne.s32.totalorder %s49, %s50
      %p64 = scmp.eq.s32.totalorder %s16, 3
      %p65 = por %p63, %p64
      %p67 = scmp.ne.s32.totalorder %s50, %s66
      %p68 = scmp.eq.s32.totalorder %s16, 0
      %p69 = por %p67, %p68
      %p70 = scmp.le.s32.totalorder 1, %s10
      %p71 = scmp.lt.s32.totalorder %s10, 5
      %p72 = pnand %p70, %p71
      %p73 = pneg %p72
      // Predicated region
      $region9: #{tpu_custom_call.1} parent=5 // pred_check
        _
      $region10: #{tpu_custom_call.1} parent=5 // pred_check_branch
        %75 = sbr.rel (%p72) target = $region12
      $region11: #{tpu_custom_call.1} parent=5 // pred_region
        %s76 = ssub.s32 %s10, 1
      $region12: #{tpu_custom_call.1} parent=5 // pred_fallthru
        _
      %p77 = scmp.lt.s32.totalorder %s10, 4
      // Predicated region
      $region13: #{tpu_custom_call.1} parent=5 // pred_check
        %p78 = pneg %p77
      $region14: #{tpu_custom_call.1} parent=5 // pred_check_branch
        %80 = sbr.rel (%p78) target = $region16
      $region15: #{tpu_custom_call.1} parent=5 // pred_region
        // Predicated region
        $region17: #{tpu_custom_call.1} parent=15 // pred_check
          %p81 = pneg %p30
        $region18: #{tpu_custom_call.1} parent=15 // pred_check_branch
          %83 = sbr.rel (%p81) target = $region20
        $region19: #{tpu_custom_call.1} parent=15 // pred_region
          %s84 = sand.u32 %s20, 1
          %s85 = scalar_lea.sflag [#allocation3], %s84
          %s86 = sand.u32 %s20, 1
          %s87 = smul.addr %s86, 32
          %s88 = scalar_lea.vmem [#allocation2], %s87
          %s89 = smul.u32 2, %s10
          %s91 = ssub.s32 512, 512
          %92 = vsyncadd %s85, %s91
          %s93 = smul.addr %s89, 2
          %s94 = smul.addr %s93, 128
          %s95 = scalar_lea.hbm %s0, %s94
          %s96 = sshll.u32 %s88, 4
          %s97 = int_to_ptr.vmem [resolvable:$true] %s96
          %102 = dma.hbm_to_vmem [thread:$0]  %s95, 512, %s97, %s85, 128, 128, 8
        $region20: #{tpu_custom_call.1} parent=15 // pred_fallthru
          _
      $region16: #{tpu_custom_call.1} parent=5 // pred_fallthru
        _
      %p103 = scmp.le.s32.totalorder 1, %s10
      %p104 = scmp.lt.s32.totalorder %s10, 5
      %p105 = pnand %p103, %p104
      %p106 = pneg %p105
      // Predicated region
      $region21: #{tpu_custom_call.1} parent=5 // pred_check
        _
      $region22: #{tpu_custom_call.1} parent=5 // pred_check_branch
        %108 = sbr.rel (%p105) target = $region24
      $region23: #{tpu_custom_call.1} parent=5 // pred_region
        %s109 = ssub.s32 %s10, 1
        %s110 = sand.u32 %s23, 1
        %s111 = scalar_lea.sflag [#allocation3], %s110
        %s112 = sand.u32 %s23, 1
        %s113 = smul.addr %s112, 32
        %s114 = scalar_lea.vmem [#allocation2], %s113
        // Predicated region
        $region25: #{tpu_custom_call.1} parent=23 // pred_check
          %p115 = pneg %p36
        $region26: #{tpu_custom_call.1} parent=23 // pred_check_branch
          %117 = sbr.rel (%p115) target = $region28
        $region27: #{tpu_custom_call.1} parent=23 // pred_region
          %118 = dma.done %s111, 512
        $region28: #{tpu_custom_call.1} parent=23 // pred_fallthru
          _
        %s119 = sand.u32 %s23, 1
        %s120 = scalar_lea.sflag [#allocation3], %s119
        %s121 = sand.u32 %s23, 1
        %s122 = smul.addr %s121, 32
        %s123 = scalar_lea.vmem [#allocation2], %s122
        %p124 = pneg %p36
        %p125 = pneg %p33
        %p126 = pneg %p62
        %p127 = pneg %p59
        %s128 = smul.u32 2, %s15
        %p129 = scmp.lt.s32.totalorder %s128, 7
        %s130 = scalar_select %p129, %s128, 7
        %s131 = smul.addr %s130, 3
        %s132 = smul.addr %s131, 8
        %s133 = scalar_lea.vmem %s1, %s132
        %s134 = smul.u32 2, %s15
        %s135 = smul.u32 2, %s15
        %p136 = scmp.lt.s32.totalorder %s135, 7
        %s137 = scalar_select %p136, %s135, 7
        %s138 = smul.addr %s137, 3
        %s139 = smul.addr %s138, 8
        %s140 = scalar_lea.vmem %s1, %s139
        %s141 = smul.u32 2, %s15
        %v142 = vld [vmem:[%s114] sm:$0xff]
        %v143 = vld [vmem:[%s114 + $0x8] sm:$0xff]
        %v144 = vld [vmem:[%s114 + $0x10] sm:$0xff]
        %v145 = vld [vmem:[%s114 + $0x18] sm:$0xff]
        %150 = vrot.lane.b32.xlu0 %v142, 1
        %v151 = vpop.permute.xlu0 %150
        %152 = vrot.lane.b32.xlu0 %v143, 1
        %v153 = vpop.permute.xlu0 %152
        %154 = vrot.lane.b32.xlu0 %v144, 1
        %v155 = vpop.permute.xlu0 %154
        %156 = vrot.lane.b32.xlu0 %v145, 1
        %v157 = vpop.permute.xlu0 %156
        %vm162 = vcmask 7168
        %v163 = vsel %vm162, 0.0, %v151
        %v164 = vsel %vm162, 0.0, %v153
        %v165 = vsel %vm162, 0.0, %v155
        %v166 = vsel %vm162, 0.0, %v157
        %vm167 = vcmask 138240
        %v168 = vsel %vm167, %v163, 0.0
        %v169 = vsel %vm167, %v164, 0.0
        %v170 = vsel %vm167, %v165, 0.0
        %v171 = vsel %vm167, %v166, 0.0
        %vm172 = vcmask 139264
        %173 = vst.msk [vmem:[%s140] sm:$0x1] %vm172, 0.0
        %174 = vst.msk [vmem:[%s140 + $0x18] sm:$0x1] %vm172, 0.0
        %175 = vst.msk [vmem:[%s140 + $0x11] sm:$0x1] %vm172, 0.0
        %176 = vst.msk [vmem:[%s140 + $0x29] sm:$0x1] %vm172, 0.0
        %vm177 = vcmask 146432
        %178 = vst.msk [vmem:[%s140 + $0x1] sm:$0xff] %vm177, %v168
        %179 = vst.msk [vmem:[%s140 + $0x9] sm:$0xff] %vm177, %v169
        %180 = vst.msk [vmem:[%s140 + $0x19] sm:$0xff] %vm177, %v170
        %181 = vst.msk [vmem:[%s140 + $0x21] sm:$0xff] %vm177, %v171
        %s182 = smul.u32 2, %s15
        %p183 = scmp.lt.s32.totalorder %s182, 7
        %s184 = scalar_select %p183, %s182, 7
        %s185 = smul.addr %s184, 3
        %s186 = smul.addr %s185, 8
        %s187 = scalar_lea.vmem %s1, %s186
        // Predicated region
        $region29: #{tpu_custom_call.1} parent=23 // pred_check
          %p188 = pneg %p59
        $region30: #{tpu_custom_call.1} parent=23 // pred_check_branch
          %190 = sbr.rel (%p188) target = $region32
        $region31: #{tpu_custom_call.1} parent=23 // pred_region
          %s191 = smul.u32 2, %s15
        $region32: #{tpu_custom_call.1} parent=23 // pred_fallthru
          _
      $region24: #{tpu_custom_call.1} parent=5 // pred_fallthru
        _
      %p192 = scmp.le.s32.totalorder 2, %s10
      // Predicated region
      $region33: #{tpu_custom_call.1} parent=5 // pred_check
        %p193 = pneg %p192
      $region34: #{tpu_custom_call.1} parent=5 // pred_check_branch
        %195 = sbr.rel (%p193) target = $region36
      $region35: #{tpu_custom_call.1} parent=5 // pred_region
        %s196 = ssub.s32 %s10, 2
        // Predicated region
        $region37: #{tpu_custom_call.1} parent=35 // pred_check
          %p197 = pneg %p65
        $region38: #{tpu_custom_call.1} parent=35 // pred_check_branch
          %199 = sbr.rel (%p197) target = $region40
        $region39: #{tpu_custom_call.1} parent=35 // pred_region
          %s200 = smul.u32 2, %s16
          %p201 = scmp.lt.s32.totalorder %s200, 7
          %s202 = scalar_select %p201, %s200, 7
          %s203 = smul.addr %s202, 3
          %s204 = smul.addr %s203, 8
          %s205 = scalar_lea.vmem %s1, %s204
        $region40: #{tpu_custom_call.1} parent=35 // pred_fallthru
          _
      $region36: #{tpu_custom_call.1} parent=5 // pred_fallthru
        _
    $region6: #{tpu_custom_call.1} parent=1 // loop_footer
      %s14 = sadd.s32 1, %s10
    $region7: #{tpu_custom_call.1} parent=1 // loop_footer_branch
      %9 = sbr.rel target = $region3
    $region8: #{tpu_custom_call.1} parent=1 // loop_exit
      _
    %206 = vsyncpa [#allocation3], 1
    %s207 = scalar_lea.sflag [#allocation3], 1
    %208 = vsyncpa %s207, 1

</llo_original>
